<compile_context>
chip_gen: v7x
topology: tpu7x:2x2x1
jax: 0.10.0
libtpu: 0.0.40
codegen_flags: <defaults>
</compile_context>

<pallas_src>
import jax
import jax.numpy as jnp
from jax.experimental import pallas as pl
from jax.experimental.pallas import tpu as pltpu

INPUT_SIZE = 5
OUTPUT_SIZE = 2


def linear_kernel(x_ref, w_ref, b_ref, o_ref):
    # x: (tb, K=5), w: (K=5, N=2) pre-transposed in the wrapper, b: (1, N=2).
    # Logical (unpadded) K/N — Mosaic zero-masks the lane padding for the MXU
    # contraction, so no manual zero-fill is needed (and would be wrong to skip
    # only if we staged into raw VMEM scratch ourselves, which we don't).
    y = jnp.dot(x_ref[...], w_ref[...], preferred_element_type=jnp.float32)
    o_ref[...] = (y + b_ref[...]).astype(o_ref.dtype)


def linear_forward(x, weight, bias, *, block_b=4096):
    """x: (B, in) f32, weight: (out, in) f32, bias: (out,) f32 -> (B, out)."""
    B, K = x.shape
    N = weight.shape[0]

    x = x.astype(jnp.float32)
    w_t = weight.T.astype(jnp.float32)            # (K, N): no in-kernel transpose
    b_2d = bias.astype(jnp.float32).reshape(1, N)

    cost = pl.CostEstimate(
        flops=2 * B * K * N,
        bytes_accessed=(B * K + K * N + N + B * N) * 4,
        transcendentals=0,
    )

    if B <= block_b:
        # Tutorial-sized batch: one VMEM-resident call, no grid, no padding,
        # no pipeline machinery — the whole thing is fixed overhead anyway.
        return pl.pallas_call(
            linear_kernel,
            out_shape=jax.ShapeDtypeStruct((B, N), jnp.float32),
            in_specs=[
                pl.BlockSpec(memory_space=pltpu.MemorySpace.VMEM),
                pl.BlockSpec(memory_space=pltpu.MemorySpace.VMEM),
                pl.BlockSpec(memory_space=pltpu.MemorySpace.VMEM),
            ],
            out_specs=pl.BlockSpec(memory_space=pltpu.MemorySpace.VMEM),
            cost_estimate=cost,
        )(x, w_t, b_2d)

    # DataLoader-scale batch: tile only the batch dimension. Since B > block_b
    # the grid has >= 2 steps, so the "parallel" axis can actually be split
    # across both v7x TensorCores. The trailing block may be partial; Pallas
    # masks out-of-bounds writes, and the garbage rows are never observed.
    tb = block_b
    grid = (pl.cdiv(B, tb),)
    return pl.pallas_call(
        linear_kernel,
        out_shape=jax.ShapeDtypeStruct((B, N), jnp.float32),
        grid=grid,
        in_specs=[
            pl.BlockSpec((tb, K), lambda i: (i, 0)),   # (tb, 5): unpadded rows
            pl.BlockSpec((K, N), lambda i: (0, 0)),    # weight resident in VMEM
            pl.BlockSpec((1, N), lambda i: (0, 0)),    # bias resident in VMEM
        ],
        out_specs=pl.BlockSpec((tb, N), lambda i: (i, 0)),  # narrow (tb, 2) writeback
        compiler_params=pltpu.CompilerParams(
            dimension_semantics=("parallel",),
        ),
        cost_estimate=cost,
    )(x, w_t, b_2d)


if __name__ == "__main__":
    key = jax.random.PRNGKey(0)
    kx, kw, kb, kx2 = jax.random.split(key, 4)

    # Deterministic parameter init mimicking nn.Linear's default
    # (uniform in [-1/sqrt(in_features), 1/sqrt(in_features)]).
    bound = 1.0 / jnp.sqrt(jnp.float32(INPUT_SIZE))
    weight = jax.random.uniform(
        kw, (OUTPUT_SIZE, INPUT_SIZE), jnp.float32, -bound, bound
    )
    bias = jax.random.uniform(kb, (OUTPUT_SIZE,), jnp.float32, -bound, bound)

    # Small batch (one DataLoader chunk, like the tutorial) -> no-grid path.
    batch = 8
    x = jax.random.normal(kx, (batch, INPUT_SIZE), jnp.float32)
    out = jax.block_until_ready(linear_forward(x, weight, bias))
    ref = x @ weight.T + bias
    assert out.shape == (batch, OUTPUT_SIZE)
    assert jnp.allclose(out, ref, atol=1e-5, rtol=1e-5)

    # Larger batch (not a multiple of the tile) -> batch-tiled parallel path
    # with a partial trailing block.
    batch2 = 10000
    x2 = jax.random.normal(kx2, (batch2, INPUT_SIZE), jnp.float32)
    out2 = jax.block_until_ready(linear_forward(x2, weight, bias, block_b=4096))
    ref2 = x2 @ weight.T + bias
    assert out2.shape == (batch2, OUTPUT_SIZE)
    assert jnp.allclose(out2, ref2, atol=1e-5, rtol=1e-5)

    # The PyTorch module prints sizes inside forward (a side effect only);
    # reproduce that informational print on the host, outside the kernel.
    print("\tIn Model: input size", x.shape, "output size", out.shape)
    print("KERNEL_OK")
</pallas_src>

<mosaic_0001>
module attributes {stable_mosaic.version = 11 : i64} {
  func.func @linear_kernel(%arg0: memref<8x5xf32, #tpu.memory_space<vmem>>, %arg1: memref<5x2xf32, #tpu.memory_space<vmem>>, %arg2: memref<1x2xf32, #tpu.memory_space<vmem>>, %arg3: memref<8x2xf32, #tpu.memory_space<vmem>>) attributes {dimension_semantics = [], scalar_prefetch = 0 : i64, scratch_operands = 0 : i64, tpu.core_type = #tpu.core_type<tc>} {
    %c0 = arith.constant 0 : index
    %c0_0 = arith.constant 0 : index
    %0 = vector.load %arg0[%c0, %c0_0] : memref<8x5xf32, #tpu.memory_space<vmem>>, vector<8x5xf32>
    %c0_1 = arith.constant 0 : index
    %c0_2 = arith.constant 0 : index
    %1 = vector.load %arg1[%c0_1, %c0_2] : memref<5x2xf32, #tpu.memory_space<vmem>>, vector<5x2xf32>
    %cst = arith.constant dense<0.000000e+00> : vector<8x2xf32>
    %2 = tpu.matmul %0, %1, %cst {dimension_numbers = #tpu.dot_dimension_numbers<[1], [0], [0], [1], [0, 0, 1, 1], [], []>} : vector<8x5xf32>, vector<5x2xf32>, vector<8x2xf32> -> vector<8x2xf32>
    %c0_3 = arith.constant 0 : index
    %c0_4 = arith.constant 0 : index
    %3 = vector.load %arg2[%c0_3, %c0_4] : memref<1x2xf32, #tpu.memory_space<vmem>>, vector<1x2xf32>
    %4 = vector.broadcast %3 : vector<1x2xf32> to vector<8x2xf32>
    %5 = arith.addf %2, %4 : vector<8x2xf32>
    %c0_5 = arith.constant 0 : index
    %c0_6 = arith.constant 0 : index
    %6 = vector.load %arg3[%c0_5, %c0_6] : memref<8x2xf32, #tpu.memory_space<vmem>>, vector<8x2xf32>
    tpu.vector_store %arg3[%c0_5, %c0_6], %5 {strides = array<i32>} : memref<8x2xf32, #tpu.memory_space<vmem>>, vector<8x2xf32>,
    return
  }
}

</mosaic_0001>

<llo_original>
// kernel: tpu_custom_call.1
$region0: #{tpu_custom_call.1}
  #allocation0 [shape = 'u32[]', space=smem, size = 0x4, offset = 0x4, fixed_abs, tag = 'smem constant byte address 0x4 - core index']
  #allocation1 [shape = 'u32[144,128]{1,0:T(1,128)}', space=vmem, size = 0x12000, scoped, tag = 'internal scratch']
  %s0 = inlined_call_operand.vmem [shape: f32[8,5], index: 0, kind: input, shape index: {}]
  %s1 = inlined_call_operand.vmem [shape: f32[5,2], index: 1, kind: input, shape index: {}]
  %s2 = inlined_call_operand.vmem [shape: f32[1,2], index: 2, kind: input, shape index: {}]
  %s3 = inlined_call_operand.vmem [shape: f32[8,2], index: 3, kind: output, shape index: {}]
  %s4 = sld [smem:[#allocation0]]
  $region22: #{tpu_custom_call.1} parent=0
    _
  %s6 = ssub.s32 1, %s4
  %s7 = scalar_select 0, %s6, %s4
  // Predicated region
  $region2: #{tpu_custom_call.1} parent=0 // pred_check
    _
  $region3: #{tpu_custom_call.1} parent=0 // pred_check_branch
    %9 = sbr.rel (0) target = $region5
  $region4: #{tpu_custom_call.1} parent=0 // pred_region
    _
  $region5: #{tpu_custom_call.1} parent=0 // pred_fallthru
    _
  // Predicated region
  $region6: #{tpu_custom_call.1} parent=0 // pred_check
    _
  $region7: #{tpu_custom_call.1} parent=0 // pred_check_branch
    %11 = sbr.rel (0) target = $region9
  $region8: #{tpu_custom_call.1} parent=0 // pred_region
    _
  $region9: #{tpu_custom_call.1} parent=0 // pred_fallthru
    _
  // Predicated region
  $region10: #{tpu_custom_call.1} parent=0 // pred_check
    _
  $region11: #{tpu_custom_call.1} parent=0 // pred_check_branch
    %13 = sbr.rel (0) target = $region13
  $region12: #{tpu_custom_call.1} parent=0 // pred_region
    _
  $region13: #{tpu_custom_call.1} parent=0 // pred_fallthru
    _
  %v14 = vld [vmem:[%s0] sm:$0xff]
  %v15 = vld [vmem:[%s1] sm:$0x1f]
  %v16 = vld [vmem:[%s2] sm:$0x1]
  %v18 = vlaneseq
  %v19 = vshrl.u32 %v18, 7
  %v20 = vsub.s32 0, %v19
  %v21 = vrot.slane %v16, %v20
  %vm23 = vcmask 39936
  %v25 = vsel %vm23, %v14, 0
  %vm27 = vcmask 1044480
  %v29 = vsel %vm27, %v15, 0
  %31 = vmatprep.subr.mxu0 0.0
  %32 = vmatpush1.msra.mxu0 %v29
  %33 = vmatprep.subr.mxu0 0.0
  %34 = vmatpush1.msra.mxu0 0.0
  %35 = vmatprep.subr.mxu0 0.0
  %36 = vmatpush1.msra.mxu0 0.0
  %37 = vmatprep.subr.mxu0 0.0
  %38 = vmatpush1.msra.mxu0 0.0
  %39 = vmatprep.subr.mxu0 0.0
  %40 = vmatpush1.msra.mxu0 0.0
  %41 = vmatprep.subr.mxu0 0.0
  %42 = vmatpush1.msra.mxu0 0.0
  %43 = vmatprep.subr.mxu0 0.0
  %44 = vmatpush1.msra.mxu0 0.0
  %45 = vmatprep.subr.mxu0 0.0
  %46 = vmatpush1.msra.mxu0 0.0
  %47 = vmatprep.subr.mxu0 0.0
  %48 = vmatpush1.msra.mxu0 0.0
  %49 = vmatprep.subr.mxu0 0.0
  %50 = vmatpush1.msra.mxu0 0.0
  %51 = vmatprep.subr.mxu0 0.0
  %52 = vmatpush1.msra.mxu0 0.0
  %53 = vmatprep.subr.mxu0 0.0
  %54 = vmatpush1.msra.mxu0 0.0
  %55 = vmatprep.subr.mxu0 0.0
  %56 = vmatpush1.msra.mxu0 0.0
  %57 = vmatprep.subr.mxu0 0.0
  %58 = vmatpush1.msra.mxu0 0.0
  %59 = vmatprep.subr.mxu0 0.0
  %60 = vmatpush1.msra.mxu0 0.0
  %61 = vmatprep.subr.mxu0 0.0
  %62 = vmatpush1.msra.mxu0 0.0
  %63 = vmatprep.subr.mxu0 0.0
  %64 = vmatpush1.msra.mxu0 0.0
  %65 = vmatprep.subr.mxu0 0.0
  %66 = vmatpush1.msra.mxu0 0.0
  %67 = vmatprep.subr.mxu0 0.0
  %68 = vmatpush1.msra.mxu0 0.0
  %69 = vmatprep.subr.mxu0 0.0
  %70 = vmatpush1.msra.mxu0 0.0
  %71 = vmatprep.subr.mxu0 0.0
  %72 = vmatpush1.msra.mxu0 0.0
  %73 = vmatprep.subr.mxu0 0.0
  %74 = vmatpush1.msra.mxu0 0.0
  %75 = vmatprep.subr.mxu0 0.0
  %76 = vmatpush1.msra.mxu0 0.0
  %77 = vmatprep.subr.mxu0 0.0
  %78 = vmatpush1.msra.mxu0 0.0
  %79 = vmatprep.subr.mxu0 0.0
  %80 = vmatpush1.msra.mxu0 0.0
  %81 = vmatprep.subr.mxu0 0.0
  %82 = vmatpush1.msra.mxu0 0.0
  %83 = vmatprep.subr.mxu0 0.0
  %84 = vmatpush1.msra.mxu0 0.0
  %85 = vmatprep.subr.mxu0 0.0
  %86 = vmatpush1.msra.mxu0 0.0
  %87 = vmatprep.subr.mxu0 0.0
  %88 = vmatpush1.msra.mxu0 0.0
  %89 = vmatprep.subr.mxu0 0.0
  %90 = vmatpush1.msra.mxu0 0.0
  %91 = vmatprep.subr.mxu0 0.0
  %92 = vmatpush1.msra.mxu0 0.0
  %93 = vmatprep.subr.mxu0 0.0
  %94 = vmatpush1.msra.mxu0 0.0
  %95 = vmatprep.mubr.f32.mxu0 0.0
  %96 = vmatmul.mubr.f32.gmra.mrb[0].mxu0 %v25
  %v97 = vpop.f32.mrb[0].mxu0
  %v98 = vadd.f32 %v21, %v97
  %v99 = vpop.f32.mrb[0].mxu0
  %100 = vdwg.mxu0
  %vm101 = vcmask 15360
  %102 = vst.msk [vmem:[%s3] sm:$0xff] %vm101, %v98
  // Predicated region
  $region14: #{tpu_custom_call.1} parent=0 // pred_check
    _
  $region15: #{tpu_custom_call.1} parent=0 // pred_check_branch
    %104 = sbr.rel (0) target = $region17
  $region16: #{tpu_custom_call.1} parent=0 // pred_region
    _
  $region17: #{tpu_custom_call.1} parent=0 // pred_fallthru
    _
  // Predicated region
  $region18: #{tpu_custom_call.1} parent=0 // pred_check
    _
  $region19: #{tpu_custom_call.1} parent=0 // pred_check_branch
    %106 = sbr.rel (0) target = $region21
  $region20: #{tpu_custom_call.1} parent=0 // pred_region
    _
  $region21: #{tpu_custom_call.1} parent=0 // pred_fallthru
    _

</llo_original>
